<compile_context>
chip_gen: v7x
topology: tpu7x:2x2x1
jax: 0.10.0
libtpu: 0.0.40
codegen_flags: <defaults>
</compile_context>

<pallas_src>
import functools
import math

import jax
import jax.numpy as jnp
from jax.experimental import pallas as pl
from jax.experimental.pallas import tpu as pltpu


_EPS = 1e-07
_INV_TEMPERATURE = 10.0      # 1 / 0.1: multiply instead of divide
_LANE = 128                  # f32 lane width
_SUBLANE = 8                 # f32 sublane width


def _round_up(x: int, m: int) -> int:
    return (x + m - 1) // m * m


def _cdiv(a: int, b: int) -> int:
    return (a + b - 1) // b


def _on_tpu() -> bool:
    return jax.default_backend() == "tpu"


def _vmem_capacity_bytes() -> int:
    """Per-core VMEM capacity; conservative 64 MiB (v7x) fallback."""
    if _on_tpu():
        try:
            return int(pltpu.get_tpu_info().vmem_capacity_bytes)
        except Exception:
            pass
    return 64 << 20


def _default_mask_bf16() -> bool:
    """bf16 mask pipeline only on chips with bf16 VPU/EUP (v6e / v7x)."""
    if not _on_tpu():
        return False
    kind = jax.devices()[0].device_kind.lower()
    return ("v6" in kind) or ("v7" in kind)


def _uniform_from_bits(shape):
    """Uniform [0, 1) f32 from the in-kernel hardware PRNG (mantissa trick)."""
    bits = pltpu.bitcast(pltpu.prng_random_bits(shape), jnp.uint32)
    fbits = (bits >> 9) | jnp.uint32(0x3F800000)           # floats in [1, 2)
    return pltpu.bitcast(fbits, jnp.float32) - 1.0          # -> [0, 1)


def _cd_linear_kernel(*refs, use_hw_prng, with_mask, mask_bf16, matmul_bf16,
                      approx_recip, weight_regulariser, dropout_regulariser,
                      numel_per_example):
    it = iter(refs)
    seed_ref = next(it)        # SMEM (1,)  int32  (unused on the streamed-noise path)
    p_logit_ref = next(it)     # SMEM (1,)  f32
    x_ref = next(it)           # VMEM (tb, D)  f32
    w_ref = next(it)           # VMEM (D, Op)  bf16/f32 (resident)
    b_ref = next(it)           # VMEM (1, Op)  f32      (resident)
    u_ref = None if use_hw_prng else next(it)   # VMEM (tb, D) f32 streamed noise
    out_ref = next(it)         # VMEM (tb, Op) f32
    reg_ref = next(it)         # VMEM (1, 1)   f32
    mask_ref = next(it) if with_mask else None  # VMEM (tb, D) f32 (debug only)

    i = pl.program_id(0)

    # --- scalars: SMEM -> (1, 1) tiles that broadcast everywhere ---
    p = jax.nn.sigmoid(jnp.full((1, 1), p_logit_ref[0], dtype=jnp.float32))
    p_term = jnp.log(p + _EPS) - jnp.log(1.0 - p + _EPS)      # logit(p)
    inv_retain = pl.reciprocal(1.0 - p)                        # 1/(1-p), exact

    # --- uniform noise in [0, 1) ---
    if use_hw_prng:
        # NOTE: noise depends on (seed, tile index): reproducible for a fixed
        # tiling, but not bit-identical across different tile_rows choices.
        pltpu.prng_seed(seed_ref[0] + i)
        u = _uniform_from_bits(x_ref.shape)
    else:
        u = u_ref[...]

    # --- concrete-dropout keep mask: 1 - sigmoid((logit(p) + logit(u)) / temp) ---
    if mask_bf16:
        # bf16 VPU/EUP path (v6e / v7x): halves elementwise + transcendental work.
        ub = u.astype(jnp.bfloat16)
        ptb = p_term.astype(jnp.bfloat16)
        noise_logit = jnp.log(ub + _EPS) - jnp.log(1.0 - ub + _EPS)
        z = (ptb + noise_logit) * _INV_TEMPERATURE
        keep = 1.0 / (1.0 + jnp.exp(z))                        # bf16
    elif approx_recip:
        # f32 path with approx reciprocals on the EUP (TPU only).
        noise_logit = jnp.log((u + _EPS) * pl.reciprocal(1.0 - u + _EPS, approx=True))
        z = (p_term + noise_logit) * _INV_TEMPERATURE
        keep = pl.reciprocal(1.0 + jnp.exp(z), approx=True)    # = sigmoid(-z)
    else:
        # Portable f32 path (interpret / CPU checking).
        noise_logit = jnp.log(u + _EPS) - jnp.log(1.0 - u + _EPS)
        z = (p_term + noise_logit) * _INV_TEMPERATURE
        keep = 1.0 / (1.0 + jnp.exp(z))

    # --- wrapped Linear on the MXU; the 1/(1-p) scale is folded in AFTER the matmul ---
    mm_dt = jnp.bfloat16 if matmul_bf16 else jnp.float32
    if mask_bf16:
        x_masked = x_ref[...].astype(jnp.bfloat16) * keep      # already bf16
    else:
        x_masked = (x_ref[...] * keep).astype(mm_dt)
    acc = jnp.dot(x_masked, w_ref[...], preferred_element_type=jnp.float32)
    out_ref[...] = (acc * inv_retain + b_ref[...]).astype(out_ref.dtype)

    if mask_ref is not None:                                   # debug / testing only
        mask_ref[...] = keep.astype(mask_ref.dtype)

    # --- fused regulariser: W is already resident in VMEM for the matmul, so this
    #     adds no HBM traffic.  The value is identical on every grid step, so the
    #     constant-index (1,1) output is race-free even when the parallel batch
    #     axis is split across TensorCores.
    wf = w_ref[...].astype(jnp.float32)
    bf = b_ref[...]
    sos = jnp.sum(wf * wf) + jnp.sum(bf * bf)
    weights_reg = weight_regulariser * sos * inv_retain
    entropy = p * jnp.log(p) + (1.0 - p) * jnp.log(1.0 - p)    # matches torch (no eps)
    reg_ref[...] = (weights_reg
                    + entropy * (dropout_regulariser * numel_per_example)
                    ).astype(reg_ref.dtype)


def _auto_tile_rows(batch_rows, d, o_pad, w_itemsize, *, stream_noise, with_mask,
                    budget_bytes, max_rows=2048):
    """Largest batch tile (multiple of 8) such that the double-buffered pipeline
    blocks, the resident weights AND the in-kernel temporaries fit the budget."""
    it = 4
    fixed = 2 * d * o_pad * w_itemsize + 2 * o_pad * it        # dbl-buffered resident W + bias
    per_row = (2 * (d + o_pad
                    + (d if stream_noise else 0)
                    + (d if with_mask else 0)) * it            # pipeline buffers
               + 5 * d * it)                                   # u / logits / keep / x_masked temps
    avail = budget_bytes - fixed
    if avail < _SUBLANE * per_row:
        # TODO(synk): add a K-tiled (reduction grid + f32 accumulator scratch) path
        # for layers whose resident weight does not fit the per-generation budget.
        raise NotImplementedError(
            f"Resident weight ({fixed} B) does not fit the VMEM tile budget "
            f"({budget_bytes} B); K-tiling path not implemented.")
    tb = min(max_rows, _round_up(max(batch_rows, 1), _SUBLANE), avail // per_row)
    return max(_SUBLANE, (int(tb) // _SUBLANE) * _SUBLANE)


def concrete_dropout_linear(p_logit, x, w, b, *,
                            weight_regulariser, dropout_regulariser,
                            seed=0, tile_rows=None,
                            matmul_in_bf16=True, mask_in_bf16=None,
                            debug_return_mask=False):
    """ConcreteDropout.forward(x, layer=Linear) as a fused, batch-tiled Pallas kernel.

    Returns (out, reg): out = Linear(concrete_dropout(x)) of shape (B, O) and reg
    the scalar regularisation as a (1, 1) array.  With debug_return_mask=True the
    per-element keep mask is returned as a third value (testing only).
    """
    x = jnp.asarray(x, jnp.float32)
    w = jnp.asarray(w, jnp.float32)
    b = jnp.asarray(b, jnp.float32).reshape(1, -1)
    B, D = x.shape
    Dw, O = w.shape
    assert Dw == D and b.shape[1] == O

    on_tpu = _on_tpu()
    use_hw_prng = on_tpu                     # HW PRNG only lowers on a real TPU
    approx_recip = on_tpu
    matmul_in_bf16 = bool(matmul_in_bf16)
    if mask_in_bf16 is None:
        mask_in_bf16 = matmul_in_bf16 and _default_mask_bf16()
    mask_in_bf16 = bool(mask_in_bf16) and matmul_in_bf16

    # Lane-pad only the OUTPUT dim (dense stores / full MXU N-tiles).  x and W's
    # feature dim stay un-padded: a full-extent last dim is a legal block shape,
    # so we avoid an extra HBM pad pass over x.
    Op = _round_up(O, _LANE)
    if Op != O:
        w = jnp.pad(w, ((0, 0), (0, Op - O)))
        b = jnp.pad(b, ((0, 0), (0, Op - O)))
    w_item = 2 if matmul_in_bf16 else 4
    w = w.astype(jnp.bfloat16 if matmul_in_bf16 else jnp.float32)   # pre-cast once

    # Generation-aware VMEM budgets (v7x: ~38 MiB tile budget / 56 MiB limit;
    # v5e/v6e: ~96 MiB / 120 MiB).
    cap = _vmem_capacity_bytes()
    tile_budget = max(8 << 20, min(cap - (26 << 20), int(0.75 * cap)))

    Bp0 = _round_up(max(B, 1), _SUBLANE)
    if tile_rows is not None:
        tb = max(_SUBLANE, (int(tile_rows) // _SUBLANE) * _SUBLANE)
    else:
        tb = _auto_tile_rows(B, D, Op, w_item,
                             stream_noise=not use_hw_prng,
                             with_mask=debug_return_mask,
                             budget_bytes=tile_budget)
        tb = min(tb, Bp0)
        # Keep >= 2 grid steps so a 2-TensorCore chip (v7x) can split the
        # "parallel" batch axis across both cores.
        if on_tpu and Bp0 >= 2 * _SUBLANE and _cdiv(Bp0, tb) < 2:
            tb = _round_up(_cdiv(Bp0, 2), _SUBLANE)
    Bp = _round_up(max(B, 1), tb)
    if Bp != B:
        x = jnp.pad(x, ((0, Bp - B), (0, 0)))    # rows only (< tb rows of zeros)
    grid = (Bp // tb,)

    # VMEM limit: pipeline blocks + resident W/bias + in-kernel temporaries.
    itemsize = 4
    fixed = 2 * D * Op * w_item + 2 * Op * itemsize
    per_row = (2 * (D + Op
                    + (D if not use_hw_prng else 0)
                    + (D if debug_return_mask else 0)) * itemsize
               + 5 * D * itemsize)
    need = fixed + tb * per_row + (1 << 16)
    vmem_limit = int(min(max(need + (4 << 20), 16 << 20), cap - (8 << 20)))

    smem = pl.BlockSpec(memory_space=pltpu.MemorySpace.SMEM)
    in_specs = [
        smem,                                               # seed (scalar path)
        smem,                                               # p_logit (scalar path)
        pl.BlockSpec((tb, D), lambda i: (i, 0)),            # x batch tile
        pl.BlockSpec((D, Op), lambda i: (0, 0)),            # W resident
        pl.BlockSpec((1, Op), lambda i: (0, 0)),            # bias resident
    ]
    if not use_hw_prng:
        in_specs.append(pl.BlockSpec((tb, D), lambda i: (i, 0)))   # streamed noise

    out_shapes = [jax.ShapeDtypeStruct((Bp, Op), jnp.float32),
                  jax.ShapeDtypeStruct((1, 1), jnp.float32)]
    out_specs = [pl.BlockSpec((tb, Op), lambda i: (i, 0)),
                 pl.BlockSpec((1, 1), lambda i: (0, 0))]
    if debug_return_mask:
        out_shapes.append(jax.ShapeDtypeStruct((Bp, D), jnp.float32))
        out_specs.append(pl.BlockSpec((tb, D), lambda i: (i, 0)))

    seed_arr = jnp.asarray([seed], dtype=jnp.int32)
    p_logit_arr = jnp.asarray(p_logit, dtype=jnp.float32).reshape((1,))
    call_args = [seed_arr, p_logit_arr, x, w, b]
    if not use_hw_prng:
        call_args.append(jax.random.uniform(jax.random.PRNGKey(int(seed)),
                                            (Bp, D), jnp.float32))

    kernel = functools.partial(
        _cd_linear_kernel,
        use_hw_prng=use_hw_prng,
        with_mask=bool(debug_return_mask),
        mask_bf16=mask_in_bf16,
        matmul_bf16=matmul_in_bf16,
        approx_recip=approx_recip,
        weight_regulariser=float(weight_regulariser),
        dropout_regulariser=float(dropout_regulariser),
        numel_per_example=int(D))

    res = pl.pallas_call(
        kernel,
        grid=grid,
        in_specs=in_specs,
        out_specs=tuple(out_specs),
        out_shape=tuple(out_shapes),
        compiler_params=pltpu.CompilerParams(
            dimension_semantics=("parallel",),    # batch tiles across TCs on v7x
            vmem_limit_bytes=vmem_limit),
    )(*call_args)

    out = res[0][:B, :O]
    reg = res[1]
    if debug_return_mask:
        return out, reg, res[2][:B, :D]
    return out, reg


if __name__ == "__main__":
    # Small, deliberately non-128-aligned shapes: D=96 stays un-padded, O=40 pads to 128.
    B, D, O = 24, 96, 40
    weight_regulariser = 1e-6
    dropout_regulariser = 1e-5

    key = jax.random.PRNGKey(0)
    k_x, k_w, k_b = jax.random.split(key, 3)

    init_p = 0.1                                  # p_logit init = logit(0.1)
    p_logit = jnp.full((1,), math.log(init_p) - math.log(1.0 - init_p), dtype=jnp.float32)

    bound = 1.0 / math.sqrt(D)
    w = jax.random.uniform(k_w, (D, O), jnp.float32, -bound, bound)   # = W_pytorch.T
    b = jax.random.uniform(k_b, (O,), jnp.float32, -bound, bound)
    x = jax.random.normal(k_x, (B, D), jnp.float32)

    # 1) Pinned settings (f32 mask math) + debug mask for an exact reference check.
    out, reg, mask = concrete_dropout_linear(
        p_logit, x, w, b,
        weight_regulariser=weight_regulariser,
        dropout_regulariser=dropout_regulariser,
        seed=1234, tile_rows=8, matmul_in_bf16=True, mask_in_bf16=False,
        debug_return_mask=True)
    # 2) Same settings, production path -> determinism check.
    out2, reg2 = concrete_dropout_linear(
        p_logit, x, w, b,
        weight_regulariser=weight_regulariser,
        dropout_regulariser=dropout_regulariser,
        seed=1234, tile_rows=8, matmul_in_bf16=True, mask_in_bf16=False)
    # 3) Full defaults: exercises the auto tiler / auto bf16-mask selection.
    out3, reg3 = concrete_dropout_linear(
        p_logit, x, w, b,
        weight_regulariser=weight_regulariser,
        dropout_regulariser=dropout_regulariser,
        seed=1234)
    jax.block_until_ready((out, reg, mask, out2, reg2, out3, reg3))

    assert out.shape == (B, O) and reg.shape == (1, 1) and mask.shape == (B, D)
    assert out3.shape == (B, O) and reg3.shape == (1, 1)
    assert bool(jnp.all(jnp.isfinite(out))) and bool(jnp.isfinite(reg[0, 0]))
    assert bool(jnp.all(jnp.isfinite(out3))) and bool(jnp.isfinite(reg3[0, 0]))

    # Given the kernel's keep mask the forward is deterministic -> reference check
    # (reference uses the same bf16-rounded operands the kernel feeds to the MXU).
    p = float(jax.nn.sigmoid(p_logit)[0])
    w_q = w.astype(jnp.bfloat16).astype(jnp.float32)
    xm_q = (x * mask).astype(jnp.bfloat16).astype(jnp.float32)
    ref_out = (jnp.dot(xm_q, w_q, precision=jax.lax.Precision.HIGHEST)
               / (1.0 - p) + b)
    assert jnp.allclose(out, ref_out, atol=2e-3, rtol=2e-3), \
        float(jnp.max(jnp.abs(out - ref_out)))

    # Same seed + same tiling -> same noise -> identical output on the production path.
    assert jnp.allclose(out, out2, atol=1e-6, rtol=1e-6)
    assert jnp.allclose(reg, reg2)

    # Mask sanity: keep-prob ~ in [0, 1] (small slack for approx reciprocal);
    # drop fraction ~ p = 0.1 (window is > 10 sigma wide for B*D samples).
    assert bool(jnp.all((mask >= -1e-3) & (mask <= 1.0 + 1e-2)))
    drop_frac = float(jnp.mean((mask < 0.5).astype(jnp.float32)))
    assert 0.02 < drop_frac < 0.25, drop_frac

    # Regulariser: deterministic reference (same math as the torch module; the
    # sum-of-squares is taken over the bf16-resident W the kernel reduces over).
    sos = float(jnp.sum(w_q ** 2) + jnp.sum(b ** 2))
    ref_reg = (weight_regulariser * sos / (1.0 - p)
               + (p * math.log(p) + (1.0 - p) * math.log(1.0 - p))
               * dropout_regulariser * D)
    assert jnp.allclose(reg[0, 0], ref_reg, atol=1e-6, rtol=1e-4), \
        (float(reg[0, 0]), ref_reg)
    assert jnp.allclose(reg3[0, 0], ref_reg, atol=1e-6, rtol=1e-4)

    print("KERNEL_OK")
</pallas_src>

<mosaic_0001>
module attributes {stable_mosaic.version = 11 : i64} {
  func.func @_cd_linear_kernel(%arg0: i32, %arg1: memref<1xi32, #tpu.memory_space<smem>>, %arg2: memref<1xf32, #tpu.memory_space<smem>>, %arg3: memref<8x96xf32, #tpu.memory_space<vmem>>, %arg4: memref<96x128xbf16, #tpu.memory_space<vmem>>, %arg5: memref<1x128xf32, #tpu.memory_space<vmem>>, %arg6: memref<8x96xf32, #tpu.memory_space<vmem>>, %arg7: memref<8x128xf32, #tpu.memory_space<vmem>>, %arg8: memref<1x1xf32, #tpu.memory_space<vmem>>, %arg9: memref<8x96xf32, #tpu.memory_space<vmem>>) attributes {dimension_semantics = [#tpu.dimension_semantics<parallel>], iteration_bounds = array<i64: 3>, scalar_prefetch = 0 : i64, scratch_operands = 0 : i64, tpu.core_type = #tpu.core_type<tc>, window_params = [{transform_indices = @transform_0, window_bounds = array<i64: 1>}, {transform_indices = @transform_1, window_bounds = array<i64: 1>}, {transform_indices = @transform_2, window_bounds = array<i64: 8, 96>}, {pipeline_mode = #tpu.pipeline_mode<synchronous>, transform_indices = @transform_3, window_bounds = array<i64: 96, 128>}, {pipeline_mode = #tpu.pipeline_mode<synchronous>, transform_indices = @transform_4, window_bounds = array<i64: 1, 128>}, {transform_indices = @transform_5, window_bounds = array<i64: 8, 96>}, {transform_indices = @transform_6, window_bounds = array<i64: 8, 128>}, {pipeline_mode = #tpu.pipeline_mode<synchronous>, transform_indices = @transform_7, window_bounds = array<i64: 1, 1>}, {transform_indices = @transform_8, window_bounds = array<i64: 8, 96>}]} {
    %c0 = arith.constant 0 : index
    %0 = memref.load %arg2[%c0] : memref<1xf32, #tpu.memory_space<smem>>
    %1 = vector.broadcast %0 : f32 to vector<1x1xf32>
    %2 = arith.negf %1 : vector<1x1xf32>
    %3 = math.exp %2 : vector<1x1xf32>
    %cst = arith.constant 1.000000e+00 : f32
    %4 = vector.broadcast %cst : f32 to vector<1x1xf32>
    %5 = arith.addf %4, %3 : vector<1x1xf32>
    %6 = arith.divf %4, %5 : vector<1x1xf32>
    %cst_0 = arith.constant 1.000000e-07 : f32
    %7 = vector.broadcast %cst_0 : f32 to vector<1x1xf32>
    %8 = arith.addf %6, %7 : vector<1x1xf32>
    %9 = math.log %8 : vector<1x1xf32>
    %cst_1 = arith.constant 1.000000e+00 : f32
    %10 = vector.broadcast %cst_1 : f32 to vector<1x1xf32>
    %11 = arith.subf %10, %6 : vector<1x1xf32>
    %cst_2 = arith.constant 1.000000e-07 : f32
    %12 = vector.broadcast %cst_2 : f32 to vector<1x1xf32>
    %13 = arith.addf %11, %12 : vector<1x1xf32>
    %14 = math.log %13 : vector<1x1xf32>
    %15 = arith.subf %9, %14 : vector<1x1xf32>
    %cst_3 = arith.constant 1.000000e+00 : f32
    %16 = vector.broadcast %cst_3 : f32 to vector<1x1xf32>
    %17 = arith.subf %16, %6 : vector<1x1xf32>
    %18 = tpu.reciprocal %17 : vector<1x1xf32> -> vector<1x1xf32>
    %c0_4 = arith.constant 0 : index
    %c0_5 = arith.constant 0 : index
    %19 = vector.load %arg6[%c0_4, %c0_5] : memref<8x96xf32, #tpu.memory_space<vmem>>, vector<8x96xf32>
    %cst_6 = arith.constant 1.000000e-07 : f32
    %20 = vector.broadcast %cst_6 : f32 to vector<8x96xf32>
    %21 = arith.addf %19, %20 : vector<8x96xf32>
    %22 = math.log %21 : vector<8x96xf32>
    %cst_7 = arith.constant 1.000000e+00 : f32
    %23 = vector.broadcast %cst_7 : f32 to vector<8x96xf32>
    %24 = arith.subf %23, %19 : vector<8x96xf32>
    %cst_8 = arith.constant 1.000000e-07 : f32
    %25 = vector.broadcast %cst_8 : f32 to vector<8x96xf32>
    %26 = arith.addf %24, %25 : vector<8x96xf32>
    %27 = math.log %26 : vector<8x96xf32>
    %28 = arith.subf %22, %27 : vector<8x96xf32>
    %29 = vector.broadcast %15 : vector<1x1xf32> to vector<8x96xf32>
    %30 = arith.addf %29, %28 : vector<8x96xf32>
    %cst_9 = arith.constant 1.000000e+01 : f32
    %31 = vector.broadcast %cst_9 : f32 to vector<8x96xf32>
    %32 = arith.mulf %30, %31 : vector<8x96xf32>
    %33 = math.exp %32 : vector<8x96xf32>
    %cst_10 = arith.constant 1.000000e+00 : f32
    %34 = vector.broadcast %cst_10 : f32 to vector<8x96xf32>
    %35 = arith.addf %34, %33 : vector<8x96xf32>
    %cst_11 = arith.constant 1.000000e+00 : f32
    %36 = vector.broadcast %cst_11 : f32 to vector<8x96xf32>
    %37 = arith.divf %36, %35 : vector<8x96xf32>
    %c0_12 = arith.constant 0 : index
    %c0_13 = arith.constant 0 : index
    %38 = vector.load %arg3[%c0_12, %c0_13] : memref<8x96xf32, #tpu.memory_space<vmem>>, vector<8x96xf32>
    %39 = arith.mulf %38, %37 : vector<8x96xf32>
    %40 = arith.truncf %39 : vector<8x96xf32> to vector<8x96xbf16>
    %c0_14 = arith.constant 0 : index
    %c0_15 = arith.constant 0 : index
    %41 = vector.load %arg4[%c0_14, %c0_15] : memref<96x128xbf16, #tpu.memory_space<vmem>>, vector<96x128xbf16>
    %cst_16 = arith.constant dense<0.000000e+00> : vector<8x128xf32>
    %42 = tpu.matmul %40, %41, %cst_16 {dimension_numbers = #tpu.dot_dimension_numbers<[1], [0], [0], [1], [0, 0, 1, 1], [], []>} : vector<8x96xbf16>, vector<96x128xbf16>, vector<8x128xf32> -> vector<8x128xf32>
    %43 = vector.broadcast %18 : vector<1x1xf32> to vector<8x128xf32>
    %44 = arith.mulf %42, %43 : vector<8x128xf32>
    %c0_17 = arith.constant 0 : index
    %c0_18 = arith.constant 0 : index
    %45 = vector.load %arg5[%c0_17, %c0_18] : memref<1x128xf32, #tpu.memory_space<vmem>>, vector<1x128xf32>
    %46 = vector.broadcast %45 : vector<1x128xf32> to vector<8x128xf32>
    %47 = arith.addf %44, %46 : vector<8x128xf32>
    %c0_19 = arith.constant 0 : index
    %c0_20 = arith.constant 0 : index
    %48 = vector.load %arg7[%c0_19, %c0_20] : memref<8x128xf32, #tpu.memory_space<vmem>>, vector<8x128xf32>
    tpu.vector_store %arg7[%c0_19, %c0_20], %47 {strides = array<i32>} : memref<8x128xf32, #tpu.memory_space<vmem>>, vector<8x128xf32>,
    %c0_21 = arith.constant 0 : index
    %c0_22 = arith.constant 0 : index
    %49 = vector.load %arg9[%c0_21, %c0_22] : memref<8x96xf32, #tpu.memory_space<vmem>>, vector<8x96xf32>
    tpu.vector_store %arg9[%c0_21, %c0_22], %37 {strides = array<i32>} : memref<8x96xf32, #tpu.memory_space<vmem>>, vector<8x96xf32>,
    %c0_23 = arith.constant 0 : index
    %c0_24 = arith.constant 0 : index
    %50 = vector.load %arg4[%c0_23, %c0_24] : memref<96x128xbf16, #tpu.memory_space<vmem>>, vector<96x128xbf16>
    %51 = arith.extf %50 : vector<96x128xbf16> to vector<96x128xf32>
    %c0_25 = arith.constant 0 : index
    %c0_26 = arith.constant 0 : index
    %52 = vector.load %arg5[%c0_25, %c0_26] : memref<1x128xf32, #tpu.memory_space<vmem>>, vector<1x128xf32>
    %53 = arith.mulf %51, %51 : vector<96x128xf32>
    %54 = vector.shape_cast %53 : vector<96x128xf32> to vector<1x96x128xf32>
    %cst_27 = arith.constant dense<0.000000e+00> : vector<1xf32>
    %55 = vector.multi_reduction <add>, %54, %cst_27 [1, 2] : vector<1x96x128xf32> to vector<1xf32>
    %56 = vector.shape_cast %55 : vector<1xf32> to vector<1x1x1xf32>
    %57 = vector.extract %56[0, 0, 0] : f32 from vector<1x1x1xf32>
    %58 = arith.mulf %52, %52 : vector<1x128xf32>
    %59 = vector.shape_cast %58 : vector<1x128xf32> to vector<1x1x128xf32>
    %cst_28 = arith.constant dense<0.000000e+00> : vector<1xf32>
    %60 = vector.multi_reduction <add>, %59, %cst_28 [1, 2] : vector<1x1x128xf32> to vector<1xf32>
    %61 = vector.shape_cast %60 : vector<1xf32> to vector<1x1x1xf32>
    %62 = vector.extract %61[0, 0, 0] : f32 from vector<1x1x1xf32>
    %63 = arith.addf %57, %62 : f32
    %cst_29 = arith.constant 9.99999997E-7 : f32
    %64 = arith.mulf %cst_29, %63 : f32
    %65 = vector.broadcast %64 : f32 to vector<1x1xf32>
    %66 = arith.mulf %65, %18 : vector<1x1xf32>
    %67 = math.log %6 : vector<1x1xf32>
    %68 = arith.mulf %6, %67 : vector<1x1xf32>
    %cst_30 = arith.constant 1.000000e+00 : f32
    %69 = vector.broadcast %cst_30 : f32 to vector<1x1xf32>
    %70 = arith.subf %69, %6 : vector<1x1xf32>
    %cst_31 = arith.constant 1.000000e+00 : f32
    %71 = vector.broadcast %cst_31 : f32 to vector<1x1xf32>
    %72 = arith.subf %71, %6 : vector<1x1xf32>
    %73 = math.log %72 : vector<1x1xf32>
    %74 = arith.mulf %70, %73 : vector<1x1xf32>
    %75 = arith.addf %68, %74 : vector<1x1xf32>
    %cst_32 = arith.constant 9.59999975E-4 : f32
    %76 = vector.broadcast %cst_32 : f32 to vector<1x1xf32>
    %77 = arith.mulf %75, %76 : vector<1x1xf32>
    %78 = arith.addf %66, %77 : vector<1x1xf32>
    %c0_33 = arith.constant 0 : index
    %c0_34 = arith.constant 0 : index
    %79 = vector.load %arg8[%c0_33, %c0_34] : memref<1x1xf32, #tpu.memory_space<vmem>>, vector<1x1xf32>
    tpu.vector_store %arg8[%c0_33, %c0_34], %78 {strides = array<i32>} : memref<1x1xf32, #tpu.memory_space<vmem>>, vector<1x1xf32>,
    return
  }
  func.func @transform_0(%arg0: i32) -> i32 {
    %c0_i32 = arith.constant 0 : i32
    %c0_i32_0 = arith.constant 0 : i32
    return %c0_i32 : i32
  }
  func.func @transform_1(%arg0: i32) -> i32 {
    %c0_i32 = arith.constant 0 : i32
    %c0_i32_0 = arith.constant 0 : i32
    return %c0_i32 : i32
  }
  func.func @transform_2(%arg0: i32) -> (i32, i32) {
    %c0_i32 = arith.constant 0 : i32
    %c0_i32_0 = arith.constant 0 : i32
    return %arg0, %c0_i32 : i32, i32
  }
  func.func @transform_3(%arg0: i32) -> (i32, i32) {
    %c0_i32 = arith.constant 0 : i32
    %c0_i32_0 = arith.constant 0 : i32
    %c0_i32_1 = arith.constant 0 : i32
    return %c0_i32, %c0_i32_0 : i32, i32
  }
  func.func @transform_4(%arg0: i32) -> (i32, i32) {
    %c0_i32 = arith.constant 0 : i32
    %c0_i32_0 = arith.constant 0 : i32
    %c0_i32_1 = arith.constant 0 : i32
    return %c0_i32, %c0_i32_0 : i32, i32
  }
  func.func @transform_5(%arg0: i32) -> (i32, i32) {
    %c0_i32 = arith.constant 0 : i32
    %c0_i32_0 = arith.constant 0 : i32
    return %arg0, %c0_i32 : i32, i32
  }
  func.func @transform_6(%arg0: i32) -> (i32, i32) {
    %c0_i32 = arith.constant 0 : i32
    %c0_i32_0 = arith.constant 0 : i32
    return %arg0, %c0_i32 : i32, i32
  }
  func.func @transform_7(%arg0: i32) -> (i32, i32) {
    %c0_i32 = arith.constant 0 : i32
    %c0_i32_0 = arith.constant 0 : i32
    %c0_i32_1 = arith.constant 0 : i32
    return %c0_i32, %c0_i32_0 : i32, i32
  }
  func.func @transform_8(%arg0: i32) -> (i32, i32) {
    %c0_i32 = arith.constant 0 : i32
    %c0_i32_0 = arith.constant 0 : i32
    return %arg0, %c0_i32 : i32, i32
  }
}

</mosaic_0001>

<llo_original>
// kernel: tpu_custom_call.1
$region0: #{tpu_custom_call.1}
  #allocation0 [shape = 'u32[]', space=smem, size = 0x4, offset = 0x4, fixed_abs, tag = 'smem constant byte address 0x4 - core index']
  #allocation1 [shape = 'u32[144,128]{1,0:T(1,128)}', space=vmem, size = 0x12000, scoped, tag = 'internal scratch']
  #allocation2 [shape = 's32[1]{0:T(128)S(6)}', space=smem, size = 0x200, scoped, tag = 'scoped memory for tpu_custom_call.1']
  #allocation3 [shape = 'f32[1]{0:T(128)S(6)}', space=smem, size = 0x200, scoped, tag = 'scoped memory for tpu_custom_call.1']
  %s0 = inlined_call_operand.<no memory space> [shape: s32[1], index: 0, kind: input, shape index: {}]
  %s1 = inlined_call_operand.<no memory space> [shape: f32[1], index: 1, kind: input, shape index: {}]
  %s2 = inlined_call_operand.hbm [shape: f32[24,96], index: 2, kind: input, shape index: {}]
  %s3 = inlined_call_operand.hbm [shape: bf16[96,128], index: 3, kind: input, shape index: {}]
  %s4 = inlined_call_operand.vmem [shape: f32[1,128], index: 4, kind: input, shape index: {}]
  %s5 = inlined_call_operand.hbm [shape: f32[24,96], index: 5, kind: input, shape index: {}]
  %s6 = inlined_call_operand.hbm [shape: f32[24,128], index: 6, kind: output, shape index: {0}]
  %s7 = inlined_call_operand.hbm [shape: f32[1,1], index: 7, kind: output, shape index: {1}]
  %s8 = inlined_call_operand.hbm [shape: f32[24,96], index: 8, kind: output, shape index: {2}]
  %9 = xla_tuple %s6, %s7, %s8
  %s10 = sld [smem:[#allocation0]]
  $region85: #{tpu_custom_call.1} parent=0
    _
  %s12 = ssub.s32 1, %s10
  %s13 = scalar_select 0, %s12, %s10
  %14 = sst [smem:[#allocation2]] %s0
  %15 = sst [smem:[#allocation3]] %s1
  $region1: #{tpu_custom_call.1} parent=0
    #allocation4 [shape = 'u8[8192]{0}', space=vmem, size = 0x2000, scoped, tag = 'input window, operand 2']
    #allocation5 [shape = 's32[2]{0}', space=sflag, size = 0x8, scoped, tag = 'scoped memory for tpu_custom_call.1']
    #allocation6 [shape = 's32[2]{0}', space=sflag, size = 0x8, scoped, tag = 'scoped memory for tpu_custom_call.1']
    #allocation7 [shape = 'u8[24576]{0}', space=vmem, size = 0x6000, scoped, tag = 'input window, operand 3, single buffered']
    #allocation8 [shape = 's32[1]{0}', space=sflag, size = 0x4, scoped, tag = 'scoped memory for tpu_custom_call.1']
    #allocation9 [shape = 'u8[8192]{0}', space=vmem, size = 0x2000, scoped, tag = 'input window, operand 5']
    #allocation10 [shape = 'u8[8192]{0}', space=vmem, size = 0x2000, scoped, tag = 'output window, operand 0']
    #allocation11 [shape = 'u8[512]{0}', space=vmem, size = 0x400, scoped, tag = 'output window, operand 1, single buffered']
    #allocation12 [shape = 's32[1]{0}', space=sflag, size = 0x4, scoped, tag = 'scoped memory for tpu_custom_call.1']
    #allocation13 [shape = 'u8[8192]{0}', space=vmem, size = 0x2000, scoped, tag = 'output window, operand 2']
    %16 = vsyncpa [#allocation5], 0
    %s17 = scalar_lea.sflag [#allocation5], 1
    %18 = vsyncpa %s17, 0
    %19 = vsyncpa [#allocation8], 0
    %20 = vsyncpa [#allocation6], 0
    %s21 = scalar_lea.sflag [#allocation6], 1
    %22 = vsyncpa %s21, 0
    %23 = vsyncpa [#allocation12], 0
    loop: start=0, step=1, limit=5
    $region2: #{tpu_custom_call.1} parent=1 // loop_pre_header
      _
    $region3: #{tpu_custom_call.1} parent=1 // loop_header
      %s25 = sphi 0, %s29
      %p26 = scmp.ge.s32.totalorder %s25, 5
      %s33 = sphi 0, %s33
      %s35 = sphi 0, %s33
      %s36 = sphi 0, %s35
      %s50 = sphi 0, %s36
      %s54 = sphi 0, %s54
      %s56 = sphi 0, %s54
      %s57 = sphi 0, %s56
      %s71 = sphi 0, %s57
      %s77 = sphi 0, %s79
      %s80 = sphi 0, %s77
      %s81 = sphi 0, %s80
      %s97 = sphi 0, %s81
      %s101 = sphi 0, %s101
      %s103 = sphi 0, %s101
      %s104 = sphi 0, %s103
      %s118 = sphi 0, %s104
      %s122 = sphi 0, %s122
      %s124 = sphi 0, %s122
      %s125 = sphi 0, %s124
      %s139 = sphi 0, %s125
      %s145 = sphi 0, %s147
      %s148 = sphi 0, %s145
      %s149 = sphi 0, %s148
      %s165 = sphi 0, %s149
      %s171 = sphi 0, %s173
      %s174 = sphi 0, %s171
      %s175 = sphi 0, %s174
      %s191 = sphi 0, %s175
      %s195 = sphi 0, %s195
      %s197 = sphi 0, %s195
      %s198 = sphi 0, %s197
      %s212 = sphi 0, %s198
      %s218 = sphi 0, %s220
      %s221 = sphi 0, %s218
      %s222 = sphi 0, %s221
      %s238 = sphi 0, %s222
    $region4: #{tpu_custom_call.1} parent=1 // loop_header_branch
      %28 = sbr.rel (%p26) target = $region8
    $region5: #{tpu_custom_call.1} parent=1 // loop_body
      %s30 = ssub.s32 %s25, 1
      %s31 = ssub.s32 %s25, 2
      %s32 = sadd.s32 %s25, 1
      %s34 = sadd.s32 %s33, 1
      %p37 = scmp.eq.s32.totalorder %s25, 2
      %p38 = scmp.ne.s32.totalorder %s33, %s35
      %p39 = scmp.eq.s32.totalorder %s25, 0
      %p40 = por %p38, %p39
      %p41 = scmp.ne.s32.totalorder %s33, %s35
      %p42 = scmp.eq.s32.totalorder %s30, 2
      %p43 = por %p41, %p42
      %p44 = scmp.ne.s32.totalorder %s35, %s36
      %p45 = scmp.eq.s32.totalorder %s30, 0
      %p46 = por %p44, %p45
      %p47 = scmp.ne.s32.totalorder %s35, %s36
      %p48 = scmp.eq.s32.totalorder %s31, 2
      %p49 = por %p47, %p48
      %p51 = scmp.ne.s32.totalorder %s36, %s50
      %p52 = scmp.eq.s32.totalorder %s31, 0
      %p53 = por %p51, %p52
      %s55 = sadd.s32 %s54, 1
      %p58 = scmp.eq.s32.totalorder %s25, 2
      %p59 = scmp.ne.s32.totalorder %s54, %s56
      %p60 = scmp.eq.s32.totalorder %s25, 0
      %p61 = por %p59, %p60
      %p62 = scmp.ne.s32.totalorder %s54, %s56
      %p63 = scmp.eq.s32.totalorder %s30, 2
      %p64 = por %p62, %p63
      %p65 = scmp.ne.s32.totalorder %s56, %s57
      %p66 = scmp.eq.s32.totalorder %s30, 0
      %p67 = por %p65, %p66
      %p68 = scmp.ne.s32.totalorder %s56, %s57
      %p69 = scmp.eq.s32.totalorder %s31, 2
      %p70 = por %p68, %p69
      %p72 = scmp.ne.s32.totalorder %s57, %s71
      %p73 = scmp.eq.s32.totalorder %s31, 0
      %p74 = por %p72, %p73
      %s75 = ssub.s32 %s25, %s32
      %p76 = scmp.eq.s32.totalorder %s75, 0
      %s78 = sadd.s32 %s77, 1
      %s79 = scalar_select %p76, %s77, %s78
      %p82 = pneg %p76
      %p83 = scmp.eq.s32.totalorder %s25, 2
      %p84 = por %p82, %p83
      %p85 = scmp.ne.s32.totalorder %s77, %s80
      %p86 = scmp.eq.s32.totalorder %s25, 0
      %p87 = por %p85, %p86
      %p88 = scmp.ne.s32.totalorder %s77, %s80
      %p89 = scmp.eq.s32.totalorder %s30, 2
      %p90 = por %p88, %p89
      %p91 = scmp.ne.s32.totalorder %s80, %s81
      %p92 = scmp.eq.s32.totalorder %s30, 0
      %p93 = por %p91, %p92
      %p94 = scmp.ne.s32.totalorder %s80, %s81
      %p95 = scmp.eq.s32.totalorder %s31, 2
      %p96 = por %p94, %p95
      %p98 = scmp.ne.s32.totalorder %s81, %s97
      %p99 = scmp.eq.s32.totalorder %s31, 0
      %p100 = por %p98, %p99
      %s102 = sadd.s32 %s101, 1
      %p105 = scmp.eq.s32.totalorder %s25, 2
      %p106 = scmp.ne.s32.totalorder %s101, %s103
      %p107 = scmp.eq.s32.totalorder %s25, 0
      %p108 = por %p106, %p107
      %p109 = scmp.ne.s32.totalorder %s101, %s103
      %p110 = scmp.eq.s32.totalorder %s30, 2
      %p111 = por %p109, %p110
      %p112 = scmp.ne.s32.totalorder %s103, %s104
      %p113 = scmp.eq.s32.totalorder %s30, 0
      %p114 = por %p112, %p113
      %p115 = scmp.ne.s32.totalorder %s103, %s104
      %p116 = scmp.eq.s32.totalorder %s31, 2
      %p117 = por %p115, %p116
      %p119 = scmp.ne.s32.totalorder %s104, %s118
      %p120 = scmp.eq.s32.totalorder %s31, 0
      %p121 = por %p119, %p120
      %s123 = sadd.s32 %s122, 1
      %p126 = scmp.eq.s32.totalorder %s25, 2
      %p127 = scmp.ne.s32.totalorder %s122, %s124
      %p128 = scmp.eq.s32.totalorder %s25, 0
      %p129 = por %p127, %p128
      %p130 = scmp.ne.s32.totalorder %s122, %s124
      %p131 = scmp.eq.s32.totalorder %s30, 2
      %p132 = por %p130, %p131
      %p133 = scmp.ne.s32.totalorder %s124, %s125
      %p134 = scmp.eq.s32.totalorder %s30, 0
      %p135 = por %p133, %p134
      %p136 = scmp.ne.s32.totalorder %s124, %s125
      %p137 = scmp.eq.s32.totalorder %s31, 2
      %p138 = por %p136, %p137
      %p140 = scmp.ne.s32.totalorder %s125, %s139
      %p141 = scmp.eq.s32.totalorder %s31, 0
      %p142 = por %p140, %p141
      %s143 = ssub.s32 %s25, %s32
      %p144 = scmp.eq.s32.totalorder %s143, 0
      %s146 = sadd.s32 %s145, 1
      %s147 = scalar_select %p144, %s145, %s146
      %p150 = pneg %p144
      %p151 = scmp.eq.s32.totalorder %s25, 2
      %p152 = por %p150, %p151
      %p153 = scmp.ne.s32.totalorder %s145, %s148
      %p154 = scmp.eq.s32.totalorder %s25, 0
      %p155 = por %p153, %p154
      %p156 = scmp.ne.s32.totalorder %s145, %s148
      %p157 = scmp.eq.s32.totalorder %s30, 2
      %p158 = por %p156, %p157
      %p159 = scmp.ne.s32.totalorder %s148, %s149
      %p160 = scmp.eq.s32.totalorder %s30, 0
      %p161 = por %p159, %p160
      %p162 = scmp.ne.s32.totalorder %s148, %s149
      %p163 = scmp.eq.s32.totalorder %s31, 2
      %p164 = por %p162, %p163
      %p166 = scmp.ne.s32.totalorder %s149, %s165
      %p167 = scmp.eq.s32.totalorder %s31, 0
      %p168 = por %p166, %p167
      %s169 = ssub.s32 %s25, %s32
      %p170 = scmp.eq.s32.totalorder %s169, 0
      %s172 = sadd.s32 %s171, 1
      %s173 = scalar_select %p170, %s171, %s172
      %p176 = pneg %p170
      %p177 = scmp.eq.s32.totalorder %s25, 2
      %p178 = por %p176, %p177
      %p179 = scmp.ne.s32.totalorder %s171, %s174
      %p180 = scmp.eq.s32.totalorder %s25, 0
      %p181 = por %p179, %p180
      %p182 = scmp.ne.s32.totalorder %s171, %s174
      %p183 = scmp.eq.s32.totalorder %s30, 2
      %p184 = por %p182, %p183
      %p185 = scmp.ne.s32.totalorder %s174, %s175
      %p186 = scmp.eq.s32.totalorder %s30, 0
      %p187 = por %p185, %p186
      %p188 = scmp.ne.s32.totalorder %s174, %s175
      %p189 = scmp.eq.s32.totalorder %s31, 2
      %p190 = por %p188, %p189
      %p192 = scmp.ne.s32.totalorder %s175, %s191
      %p193 = scmp.eq.s32.totalorder %s31, 0
      %p194 = por %p192, %p193
      %s196 = sadd.s32 %s195, 1
      %p199 = scmp.eq.s32.totalorder %s25, 2
      %p200 = scmp.ne.s32.totalorder %s195, %s197
      %p201 = scmp.eq.s32.totalorder %s25, 0
      %p202 = por %p200, %p201
      %p203 = scmp.ne.s32.totalorder %s195, %s197
      %p204 = scmp.eq.s32.totalorder %s30, 2
      %p205 = por %p203, %p204
      %p206 = scmp.ne.s32.totalorder %s197, %s198
      %p207 = scmp.eq.s32.totalorder %s30, 0
      %p208 = por %p206, %p207
      %p209 = scmp.ne.s32.totalorder %s197, %s198
      %p210 = scmp.eq.s32.totalorder %s31, 2
      %p211 = por %p209, %p210
      %p213 = scmp.ne.s32.totalorder %s198, %s212
      %p214 = scmp.eq.s32.totalorder %s31, 0
      %p215 = por %p213, %p214
      %s216 = ssub.s32 %s25, %s32
      %p217 = scmp.eq.s32.totalorder %s216, 0
      %s219 = sadd.s32 %s218, 1
      %s220 = scalar_select %p217, %s218, %s219
      %p223 = pneg %p217
      %p224 = scmp.eq.s32.totalorder %s25, 2
      %p225 = por %p223, %p224
      %p226 = scmp.ne.s32.totalorder %s218, %s221
      %p227 = scmp.eq.s32.totalorder %s25, 0
      %p228 = por %p226, %p227
      %p229 = scmp.ne.s32.totalorder %s218, %s221
      %p230 = scmp.eq.s32.totalorder %s30, 2
      %p231 = por %p229, %p230
      %p232 = scmp.ne.s32.totalorder %s221, %s222
      %p233 = scmp.eq.s32.totalorder %s30, 0
      %p234 = por %p232, %p233
      %p235 = scmp.ne.s32.totalorder %s221, %s222
      %p236 = scmp.eq.s32.totalorder %s31, 2
      %p237 = por %p235, %p236
      %p239 = scmp.ne.s32.totalorder %s222, %s238
      %p240 = scmp.eq.s32.totalorder %s31, 0
      %p241 = por %p239, %p240
      %p242 = scmp.le.s32.totalorder 1, %s25
      %p243 = scmp.lt.s32.totalorder %s25, 4
      %p244 = pnand %p242, %p243
      %p245 = pneg %p244
      // Predicated region
      $region9: #{tpu_custom_call.1} parent=5 // pred_check
        _
      $region10: #{tpu_custom_call.1} parent=5 // pred_check_branch
        %247 = sbr.rel (%p244) target = $region12
      $region11: #{tpu_custom_call.1} parent=5 // pred_region
        %s248 = ssub.s32 %s25, 1
        // Predicated region
        $region13: #{tpu_custom_call.1} parent=11 // pred_check
          %p249 = pneg %p46
        $region14: #{tpu_custom_call.1} parent=11 // pred_check_branch
          %251 = sbr.rel (%p249) target = $region16
        $region15: #{tpu_custom_call.1} parent=11 // pred_region
          _
        $region16: #{tpu_custom_call.1} parent=11 // pred_fallthru
          _
        // Predicated region
        $region17: #{tpu_custom_call.1} parent=11 // pred_check
          %p252 = pneg %p67
        $region18: #{tpu_custom_call.1} parent=11 // pred_check_branch
          %254 = sbr.rel (%p252) target = $region20
        $region19: #{tpu_custom_call.1} parent=11 // pred_region
          _
        $region20: #{tpu_custom_call.1} parent=11 // pred_fallthru
          _
        // Predicated region
        $region21: #{tpu_custom_call.1} parent=11 // pred_check
          %p255 = pneg %p114
        $region22: #{tpu_custom_call.1} parent=11 // pred_check_branch
          %257 = sbr.rel (%p255) target = $region24
        $region23: #{tpu_custom_call.1} parent=11 // pred_region
          %s259 = ssub.s32 768, 768
          %260 = vsyncadd [#allocation8], %s259
          %s261 = sshll.u32 [#allocation7], 4
          %s262 = int_to_ptr.vmem [resolvable:$true] %s261
          %267 = dma.hbm_to_vmem [thread:$0]  %s3, 768, %s262, [#allocation8], 64, 64, 4
        $region24: #{tpu_custom_call.1} parent=11 // pred_fallthru
          _
        // Predicated region
        $region25: #{tpu_custom_call.1} parent=11 // pred_check
          %p268 = pneg %p135
        $region26: #{tpu_custom_call.1} parent=11 // pred_check_branch
          %270 = sbr.rel (%p268) target = $region28
        $region27: #{tpu_custom_call.1} parent=11 // pred_region
          _
        $region28: #{tpu_custom_call.1} parent=11 // pred_fallthru
          _
      $region12: #{tpu_custom_call.1} parent=5 // pred_fallthru
        _
      %p271 = scmp.lt.s32.totalorder %s25, 3
      // Predicated region
      $region29: #{tpu_custom_call.1} parent=5 // pred_check
        %p272 = pneg %p271
      $region30: #{tpu_custom_call.1} parent=5 // pred_check_branch
        %274 = sbr.rel (%p272) target = $region32
      $region31: #{tpu_custom_call.1} parent=5 // pred_region
        // Predicated region
        $region33: #{tpu_custom_call.1} parent=31 // pred_check
          %p275 = pneg %p87
        $region34: #{tpu_custom_call.1} parent=31 // pred_check_branch
          %277 = sbr.rel (%p275) target = $region36
        $region35: #{tpu_custom_call.1} parent=31 // pred_region
          %s278 = sand.u32 %s25, 1
          %s279 = scalar_lea.sflag [#allocation5], %s278
          %s280 = sand.u32 %s77, 1
          %s281 = smul.addr %s280, 8
          %s282 = scalar_lea.vmem [#allocation4], %s281
          %s284 = ssub.s32 128, 128
          %285 = vsyncadd %s279, %s284
          %s286 = smul.addr %s25, 128
          %s287 = scalar_lea.hbm %s2, %s286
          %s289 = sshll.u32 %s282, 4
          %s290 = int_to_ptr.vmem [resolvable:$true] %s289
          %292 = dma.hbm_to_vmem [thread:$0]  %s287, 128, %s290, %s279
        $region36: #{tpu_custom_call.1} parent=31 // pred_fallthru
          _
        // Predicated region
        $region37: #{tpu_custom_call.1} parent=31 // pred_check
          %p293 = pneg %p155
        $region38: #{tpu_custom_call.1} parent=31 // pred_check_branch
          %295 = sbr.rel (%p293) target = $region40
        $region39: #{tpu_custom_call.1} parent=31 // pred_region
          %s296 = sand.u32 %s25, 1
          %s297 = scalar_lea.sflag [#allocation5], %s296
          %s298 = sand.u32 %s145, 1
          %s299 = smul.addr %s298, 8
          %s300 = scalar_lea.vmem [#allocation9], %s299
          %s302 = ssub.s32 128, 128
          %303 = vsyncadd %s297, %s302
          %s304 = smul.addr %s25, 128
          %s305 = scalar_lea.hbm %s5, %s304
          %s307 = sshll.u32 %s300, 4
          %s308 = int_to_ptr.vmem [resolvable:$true] %s307
          %310 = dma.hbm_to_vmem [thread:$0]  %s305, 128, %s308, %s297
        $region40: #{tpu_custom_call.1} parent=31 // pred_fallthru
          _
      $region32: #{tpu_custom_call.1} parent=5 // pred_fallthru
        _
      %p311 = scmp.le.s32.totalorder 1, %s25
      %p312 = scmp.lt.s32.totalorder %s25, 4
      %p313 = pnand %p311, %p312
      %p314 = pneg %p313
      // Predicated region
      $region41: #{tpu_custom_call.1} parent=5 // pred_check
        _
      $region42: #{tpu_custom_call.1} parent=5 // pred_check_branch
        %316 = sbr.rel (%p313) target = $region44
      $region43: #{tpu_custom_call.1} parent=5 // pred_region
        %s317 = ssub.s32 %s25, 1
        %s318 = sand.u32 %s30, 1
        %s319 = scalar_lea.sflag [#allocation5], %s318
        %s320 = sand.u32 %s80, 1
        %s321 = smul.addr %s320, 8
        %s322 = scalar_lea.vmem [#allocation4], %s321
        // Predicated region
        $region45: #{tpu_custom_call.1} parent=43 // pred_check
          %p323 = pneg %p93
        $region46: #{tpu_custom_call.1} parent=43 // pred_check_branch
          %325 = sbr.rel (%p323) target = $region48
        $region47: #{tpu_custom_call.1} parent=43 // pred_region
          %326 = dma.done %s319, 128
        $region48: #{tpu_custom_call.1} parent=43 // pred_fallthru
          _
        // Predicated region
        $region49: #{tpu_custom_call.1} parent=43 // pred_check
          %p327 = pneg %p114
        $region50: #{tpu_custom_call.1} parent=43 // pred_check_branch
          %329 = sbr.rel (%p327) target = $region52
        $region51: #{tpu_custom_call.1} parent=43 // pred_region
          %330 = dma.done [#allocation8], 768
        $region52: #{tpu_custom_call.1} parent=43 // pred_fallthru
          _
        %s331 = sand.u32 %s30, 1
        %s332 = scalar_lea.sflag [#allocation5], %s331
        %s333 = sand.u32 %s148, 1
        %s334 = smul.addr %s333, 8
        %s335 = scalar_lea.vmem [#allocation9], %s334
        // Predicated region
        $region53: #{tpu_custom_call.1} parent=43 // pred_check
          %p336 = pneg %p161
        $region54: #{tpu_custom_call.1} parent=43 // pred_check_branch
          %338 = sbr.rel (%p336) target = $region56
        $region55: #{tpu_custom_call.1} parent=43 // pred_region
          %339 = dma.done %s332, 128
        $region56: #{tpu_custom_call.1} parent=43 // pred_fallthru
          _
        %p340 = pneg %p46
        %p341 = pneg %p43
        %p342 = pneg %p67
        %p343 = pneg %p64
        %s344 = sand.u32 %s30, 1
        %s345 = scalar_lea.sflag [#allocation5], %s344
        %s346 = sand.u32 %s80, 1
        %s347 = smul.addr %s346, 8
        %s348 = scalar_lea.vmem [#allocation4], %s347
        %p349 = pneg %p93
        %p350 = pneg %p90
        %p351 = pneg %p114
        %p352 = pneg %p111
        %p353 = pneg %p135
        %p354 = pneg %p132
        %s355 = sand.u32 %s30, 1
        %s356 = scalar_lea.sflag [#allocation5], %s355
        %s357 = sand.u32 %s148, 1
        %s358 = smul.addr %s357, 8
        %s359 = scalar_lea.vmem [#allocation9], %s358
        %p360 = pneg %p161
        %p361 = pneg %p158
        %p362 = pneg %p187
        %p363 = pneg %p184
        %s364 = sand.u32 %s30, 1
        %s365 = scalar_lea.sflag [#allocation6], %s364
        %s366 = sand.u32 %s174, 1
        %s367 = smul.addr %s366, 8
        %s368 = scalar_lea.vmem [#allocation10], %s367
        %p369 = pneg %p208
        %p370 = pneg %p205
        %p371 = pneg %p234
        %p372 = pneg %p231
        %s373 = sand.u32 %s30, 1
        %s374 = scalar_lea.sflag [#allocation6], %s373
        %s375 = sand.u32 %s221, 1
        %s376 = smul.addr %s375, 8
        %s377 = scalar_lea.vmem [#allocation13], %s376
        %s379 = sld [smem:[#allocation3]]
        %v380 = vstv %s379
        %v381 = vxor.u32 %v380, 2147483648
        %v382 = vmul.f32 %v381, 1.442695
        %v383 = vpow.pop %v382
        %v384 = vadd.f32 %v383, 1.0
        %v385 = vrcp.pop %v384
        %v386 = vmul.f32 1.0, %v385
        %v387 = vadd.f32 %v386, 1e-07
        %v388 = vlog2.pop %v387
        %v389 = vmul.f32 %v388, 0.6931472
        %v390 = vsub.f32 1.0, %v386
        %v391 = vadd.f32 %v390, 1e-07
        %v392 = vlog2.pop %v391
        %v393 = vmul.f32 %v392, 0.6931472
        %v394 = vsub.f32 %v389, %v393
        %v395 = vrcp.pop %v390
        %v396 = vld [vmem:[%s335] sm:$0xff]
        %v397 = vadd.f32 %v396, 1e-07
        %v398 = vlog2.pop %v397
        %v399 = vmul.f32 %v398, 0.6931472
        %v400 = vsub.f32 1.0, %v396
        %v401 = vadd.f32 %v400, 1e-07
        %v402 = vlog2.pop %v401
        %v403 = vmul.f32 %v402, 0.6931472
        %v404 = vsub.f32 %v399, %v403
        %v405 = vadd.f32 %v394, %v404
        %v406 = vmul.f32 %v405, 10.0
        %v407 = vmul.f32 %v406, 1.442695
        %v408 = vpow.pop %v407
        %v409 = vadd.f32 %v408, 1.0
        %v410 = vrcp.pop %v409
        %v411 = vmul.f32 1.0, %v410
        %v412 = vld [vmem:[%s322] sm:$0xff]
        %v413 = vmul.f32 %v412, %v411
        %v414 = vpack.c.bf16 %v413, %v413
        %v415 = vld [vmem:[#allocation7] sm:$0xf]
        %v416 = vld [vmem:[#allocation7 + $0x4] sm:$0xf]
        %v417 = vld [vmem:[#allocation7 + $0x8] sm:$0xf]
        %v418 = vld [vmem:[#allocation7 + $0xc] sm:$0xf]
        %v419 = vld [vmem:[#allocation7 + $0x10] sm:$0xf]
        %v420 = vld [vmem:[#allocation7 + $0x14] sm:$0xf]
        %v421 = vld [vmem:[#allocation7 + $0x18] sm:$0xf]
        %v422 = vld [vmem:[#allocation7 + $0x1c] sm:$0xf]
        %v423 = vld [vmem:[#allocation7 + $0x20] sm:$0xf]
        %v424 = vld [vmem:[#allocation7 + $0x24] sm:$0xf]
        %v425 = vld [vmem:[#allocation7 + $0x28] sm:$0xf]
        %v426 = vld [vmem:[#allocation7 + $0x2c] sm:$0xf]
        %v439 = vunpack.c.l.b16 %v415
        %v440 = vunpack.c.l.b16 %v416
        %v441 = vunpack.c.l.b16 %v417
        %v442 = vunpack.c.l.b16 %v418
        %v443 = vunpack.c.l.b16 %v419
        %v444 = vunpack.c.l.b16 %v420
        %v445 = vunpack.c.l.b16 %v421
        %v446 = vunpack.c.l.b16 %v422
        %v447 = vunpack.c.l.b16 %v423
        %v448 = vunpack.c.l.b16 %v424
        %v449 = vunpack.c.l.b16 %v425
        %v450 = vunpack.c.l.b16 %v426
        %v451 = vpack.c.b16 %v440, %v439
        %v452 = vpack.c.b16 %v442, %v441
        %v453 = vpack.c.b16 %v444, %v443
        %v454 = vpack.c.b16 %v446, %v445
        %v455 = vpack.c.b16 %v448, %v447
        %v456 = vpack.c.b16 %v450, %v449
        %vm463 = vcmask 785408
        %v465 = vsel %vm463, %v414, 0
        %467 = vmatprep.subr.bf16.mxu0 0
        %468 = vmatpush1.bf16.msra.mxu0 %v451
        %469 = vmatprep.subr.bf16.mxu0 0
        %470 = vmatpush1.bf16.msra.mxu0 %v452
        %471 = vmatprep.subr.bf16.mxu0 0
        %472 = vmatpush1.bf16.msra.mxu0 %v453
        %473 = vmatprep.subr.bf16.mxu0 0
        %474 = vmatpush1.bf16.msra.mxu0 %v454
        %475 = vmatprep.subr.bf16.mxu0 0
        %476 = vmatpush1.bf16.msra.mxu0 %v455
        %477 = vmatprep.subr.bf16.mxu0 0
        %478 = vmatpush1.bf16.msra.mxu0 %v456
        %479 = vmatprep.subr.bf16.mxu0 0
        %480 = vmatpush1.bf16.msra.mxu0 0
        %481 = vmatprep.subr.bf16.mxu0 0
        %482 = vmatpush1.bf16.msra.mxu0 0
        %483 = vmatprep.subr.bf16.mxu0 0
        %484 = vmatpush1.bf16.msra.mxu0 0
        %485 = vmatprep.subr.bf16.mxu0 0
        %486 = vmatpush1.bf16.msra.mxu0 0
        %487 = vmatprep.subr.bf16.mxu0 0
        %488 = vmatpush1.bf16.msra.mxu0 0
        %489 = vmatprep.subr.bf16.mxu0 0
        %490 = vmatpush1.bf16.msra.mxu0 0
        %491 = vmatprep.subr.bf16.mxu0 0
        %492 = vmatpush1.bf16.msra.mxu0 0
        %493 = vmatprep.subr.bf16.mxu0 0
        %494 = vmatpush1.bf16.msra.mxu0 0
        %495 = vmatprep.subr.bf16.mxu0 0
        %496 = vmatpush1.bf16.msra.mxu0 0
        %497 = vmatprep.subr.bf16.mxu0 0
        %498 = vmatpush1.bf16.msra.mxu0 0
        %499 = vmatprep.mubr.bf16.mxu0 0
        %500 = vmatmul.mubr.bf16.gmra.mrb[0].mxu0 %v465
        %v501 = vpop.f32.mrb[0].mxu0
        %v502 = vadd.f32 0.0, %v501
        %v503 = vpop.f32.mrb[0].mxu0
        %v504 = vpop.f32.mrb[0].mxu0
        %v505 = vpop.f32.mrb[0].mxu0
        %506 = vdwg.mxu0
        %v507 = vmul.f32 %v502, %v395
        %v508 = vld [vmem:[%s4] sm:$0x1]
        %v510 = vlaneseq
        %v511 = vshrl.u32 %v510, 7
        %v512 = vsub.s32 0, %v511
        %v513 = vrot.slane %v508, %v512
        %v515 = vadd.f32 %v507, %v513
        %516 = vst [vmem:[%s368] sm:$0xff] %v515
        %517 = vst.msk [vmem:[%s377] sm:$0xff] %vm463, %v411
        %v518 = vld [vmem:[#allocation7] sm:$0xf]
        %v519 = vld [vmem:[#allocation7 + $0x4] sm:$0xf]
        %v520 = vld [vmem:[#allocation7 + $0x8] sm:$0xf]
        %v521 = vld [vmem:[#allocation7 + $0xc] sm:$0xf]
        %v522 = vld [vmem:[#allocation7 + $0x10] sm:$0xf]
        %v523 = vld [vmem:[#allocation7 + $0x14] sm:$0xf]
        %v524 = vld [vmem:[#allocation7 + $0x18] sm:$0xf]
        %v525 = vld [vmem:[#allocation7 + $0x1c] sm:$0xf]
        %v526 = vld [vmem:[#allocation7 + $0x20] sm:$0xf]
        %v527 = vld [vmem:[#allocation7 + $0x24] sm:$0xf]
        %v528 = vld [vmem:[#allocation7 + $0x28] sm:$0xf]
        %v529 = vld [vmem:[#allocation7 + $0x2c] sm:$0xf]
        %v530 = vunpack.c.l.bf16 %v518
        %v531 = vunpack.c.l.bf16 %v519
        %v532 = vunpack.c.l.bf16 %v520
        %v533 = vunpack.c.l.bf16 %v521
        %v534 = vunpack.c.l.bf16 %v522
        %v535 = vunpack.c.l.bf16 %v523
        %v536 = vunpack.c.l.bf16 %v524
        %v537 = vunpack.c.l.bf16 %v525
        %v538 = vunpack.c.l.bf16 %v526
        %v539 = vunpack.c.l.bf16 %v527
        %v540 = vunpack.c.l.bf16 %v528
        %v541 = vunpack.c.l.bf16 %v529
        %v542 = vld [vmem:[%s4] sm:$0x1]
        %v543 = vmul.f32 %v530, %v530
        %v544 = vmul.f32 %v531, %v531
        %v545 = vmul.f32 %v532, %v532
        %v546 = vmul.f32 %v533, %v533
        %v547 = vmul.f32 %v534, %v534
        %v548 = vmul.f32 %v535, %v535
        %v549 = vmul.f32 %v536, %v536
        %v550 = vmul.f32 %v537, %v537
        %v551 = vmul.f32 %v538, %v538
        %v552 = vmul.f32 %v539, %v539
        %v553 = vmul.f32 %v540, %v540
        %v554 = vmul.f32 %v541, %v541
        %v555 = vadd.f32 %v543, %v544
        %v556 = vadd.f32 %v555, %v545
        %v557 = vadd.f32 %v556, %v546
        %v558 = vadd.f32 %v557, %v547
        %v559 = vadd.f32 %v558, %v548
        %v560 = vadd.f32 %v559, %v549
        %v561 = vadd.f32 %v560, %v550
        %v562 = vadd.f32 %v561, %v551
        %v563 = vadd.f32 %v562, %v552
        %v564 = vadd.f32 %v563, %v553
        %v565 = vadd.f32 %v564, %v554
        %566 = vadd.xlane.f32.xlu0 %v565
        %v567 = vpop.xlane.xlu0 %566
        %v568 = vrot.slane %v567, 4
        %v569 = vadd.f32 %v567, %v568
        %v570 = vrot.slane %v569, 2
        %v571 = vadd.f32 %v569, %v570
        %v572 = vrot.slane %v571, 1
        %v573 = vadd.f32 %v571, %v572
        %s574 = vtos %v573
        %v575 = vmul.f32 %v542, %v542
        %vm576 = vcmask 1040384
        %v577 = vsel %vm576, %v575, 0.0
        %578 = vadd.xlane.f32.xlu0 %v577
        %v579 = vpop.xlane.xlu0 %578
        %v580 = vrot.slane %v579, 4
        %v581 = vadd.f32 %v579, %v580
        %v582 = vrot.slane %v581, 2
        %v583 = vadd.f32 %v581, %v582
        %v584 = vrot.slane %v583, 1
        %v585 = vadd.f32 %v583, %v584
        %s586 = vtos %v585
        %s587 = sadd.f32 %s574, %s586
        %s588 = smul.f32 %s587, 1e-06
        %v589 = vstv %s588
        %v590 = vmul.f32 %v589, %v395
        %v591 = vlog2.pop %v386
        %v592 = vmul.f32 %v591, 0.6931472
        %v593 = vmul.f32 %v386, %v592
        %v594 = vlog2.pop %v390
        %v595 = vmul.f32 %v594, 0.6931472
        %v596 = vmul.f32 %v390, %v595
        %v597 = vadd.f32 %v593, %v596
        %v598 = vmul.f32 %v597, 0.00096
        %v599 = vadd.f32 %v590, %v598
        %vm600 = vcmask 0
        %601 = vst.msk [vmem:[#allocation11] sm:$0x1] %vm600, %v599
        %s602 = sand.u32 %s30, 1
        %s603 = scalar_lea.sflag [#allocation6], %s602
        %s604 = sand.u32 %s174, 1
        %s605 = smul.addr %s604, 8
        %s606 = scalar_lea.vmem [#allocation10], %s605
        %s607 = sand.u32 %s30, 1
        %s608 = scalar_lea.sflag [#allocation6], %s607
        %s609 = sand.u32 %s221, 1
        %s610 = smul.addr %s609, 8
        %s611 = scalar_lea.vmem [#allocation13], %s610
        // Predicated region
        $region57: #{tpu_custom_call.1} parent=43 // pred_check
          %p612 = pneg %p184
        $region58: #{tpu_custom_call.1} parent=43 // pred_check_branch
          %614 = sbr.rel (%p612) target = $region60
        $region59: #{tpu_custom_call.1} parent=43 // pred_region
          %s616 = ssub.s32 128, 128
          %617 = vsyncadd %s603, %s616
          %s618 = smul.addr %s30, 128
          %s619 = scalar_lea.hbm %s6, %s618
          %s621 = sshll.u32 %s606, 4
          %s622 = int_to_ptr.vmem [resolvable:$true] %s621
          %624 = dma.vmem_to_hbm [thread:$0]  %s622, 128, %s619, %s603
        $region60: #{tpu_custom_call.1} parent=43 // pred_fallthru
          _
        // Predicated region
        $region61: #{tpu_custom_call.1} parent=43 // pred_check
          %p625 = pneg %p205
        $region62: #{tpu_custom_call.1} parent=43 // pred_check_branch
          %627 = sbr.rel (%p625) target = $region64
        $region63: #{tpu_custom_call.1} parent=43 // pred_region
          %s629 = ssub.s32 16, 16
          %630 = vsyncadd [#allocation12], %s629
          %s632 = sshll.u32 [#allocation11], 4
          %s633 = int_to_ptr.vmem [resolvable:$true] %s632
          %635 = dma.vmem_to_hbm [thread:$0]  %s633, 16, %s7, [#allocation12]
        $region64: #{tpu_custom_call.1} parent=43 // pred_fallthru
          _
        // Predicated region
        $region65: #{tpu_custom_call.1} parent=43 // pred_check
          %p636 = pneg %p231
        $region66: #{tpu_custom_call.1} parent=43 // pred_check_branch
          %638 = sbr.rel (%p636) target = $region68
        $region67: #{tpu_custom_call.1} parent=43 // pred_region
          %s640 = ssub.s32 128, 128
          %641 = vsyncadd %s608, %s640
          %s642 = smul.addr %s30, 128
          %s643 = scalar_lea.hbm %s8, %s642
          %s645 = sshll.u32 %s611, 4
          %s646 = int_to_ptr.vmem [resolvable:$true] %s645
          %648 = dma.vmem_to_hbm [thread:$0]  %s646, 128, %s643, %s608
        $region68: #{tpu_custom_call.1} parent=43 // pred_fallthru
          _
        // Predicated region
        $region69: #{tpu_custom_call.1} parent=43 // pred_check
          %p649 = pneg %p205
        $region70: #{tpu_custom_call.1} parent=43 // pred_check_branch
          %651 = sbr.rel (%p649) target = $region72
        $region71: #{tpu_custom_call.1} parent=43 // pred_region
          %652 = dma.done [#allocation12], 16
        $region72: #{tpu_custom_call.1} parent=43 // pred_fallthru
          _
      $region44: #{tpu_custom_call.1} parent=5 // pred_fallthru
        _
      %p653 = scmp.le.s32.totalorder 2, %s25
      // Predicated region
      $region73: #{tpu_custom_call.1} parent=5 // pred_check
        %p654 = pneg %p653
      $region74: #{tpu_custom_call.1} parent=5 // pred_check_branch
        %656 = sbr.rel (%p654) target = $region76
      $region75: #{tpu_custom_call.1} parent=5 // pred_region
        %s657 = ssub.s32 %s25, 2
        // Predicated region
        $region77: #{tpu_custom_call.1} parent=75 // pred_check
          %p658 = pneg %p190
        $region78: #{tpu_custom_call.1} parent=75 // pred_check_branch
          %660 = sbr.rel (%p658) target = $region80
        $region79: #{tpu_custom_call.1} parent=75 // pred_region
          %s661 = sand.u32 %s31, 1
          %s662 = scalar_lea.sflag [#allocation6], %s661
          %s663 = sand.u32 %s175, 1
          %s664 = smul.addr %s663, 8
          %s665 = scalar_lea.vmem [#allocation10], %s664
          %666 = dma.done %s662, 128
        $region80: #{tpu_custom_call.1} parent=75 // pred_fallthru
          _
        // Predicated region
        $region81: #{tpu_custom_call.1} parent=75 // pred_check
          %p667 = pneg %p237
        $region82: #{tpu_custom_call.1} parent=75 // pred_check_branch
          %669 = sbr.rel (%p667) target = $region84
        $region83: #{tpu_custom_call.1} parent=75 // pred_region
          %s670 = sand.u32 %s31, 1
          %s671 = scalar_lea.sflag [#allocation6], %s670
          %s672 = sand.u32 %s222, 1
          %s673 = smul.addr %s672, 8
          %s674 = scalar_lea.vmem [#allocation13], %s673
          %675 = dma.done %s671, 128
        $region84: #{tpu_custom_call.1} parent=75 // pred_fallthru
          _
      $region76: #{tpu_custom_call.1} parent=5 // pred_fallthru
        _
    $region6: #{tpu_custom_call.1} parent=1 // loop_footer
      %s29 = sadd.s32 1, %s25
    $region7: #{tpu_custom_call.1} parent=1 // loop_footer_branch
      %24 = sbr.rel target = $region3
    $region8: #{tpu_custom_call.1} parent=1 // loop_exit
      _
    %676 = vsyncpa [#allocation5], 1
    %s677 = scalar_lea.sflag [#allocation5], 1
    %678 = vsyncpa %s677, 1
    %679 = vsyncpa [#allocation8], 1
    %680 = vsyncpa [#allocation6], 1
    %s681 = scalar_lea.sflag [#allocation6], 1
    %682 = vsyncpa %s681, 1
    %683 = vsyncpa [#allocation12], 1

</llo_original>
